<compile_context>
chip_gen: v6e
topology: v6e:2x2x1
jax: 0.10.0
libtpu: 0.0.40
codegen_flags: <defaults>
</compile_context>

<pallas_src>
import functools

import jax
import jax.numpy as jnp
import numpy as np
from jax import lax
from jax.experimental import pallas as pl
from jax.experimental.pallas import tpu as pltpu


def _round_up(v, m):
    return (v + m - 1) // m * m


def _cdiv(a, b):
    return -(-a // b)


def _tpu_config():
    """Returns (default_block_rows, vmem_budget_bytes, is_v7x)."""
    try:
        kind = jax.devices()[0].device_kind.lower()
    except Exception:  # pragma: no cover - defensive
        kind = ""
    if "v5 lite" in kind or "v5e" in kind or "v5lite" in kind:
        # v5e: 4x128x128 MXU; 128 MiB physical VMEM.
        return 128, 100 * (1 << 20), False
    if "v6" in kind:
        # v6e: 2x256x256 MXU; 128 MiB physical VMEM.
        return 256, 100 * (1 << 20), False
    if "v7" in kind:
        # v7x: 64 MiB VMEM per TensorCore -> leave headroom for Mosaic scratch.
        return 256, 46 * (1 << 20), True
    # Unknown generation: conservative budget that fits every generation.
    return 256, 46 * (1 << 20), False


def _projection_kernel(x_ref, w1_ref, vec_ref, w2_ref, b2_ref, o_ref, hn_ref,
                       *, eps, neg_slope, inv_h, apply_mask):
    """fc1 + LeakyReLU + LayerNorm into the hn scratch (once per row tile),
    then one fc2 output-column tile."""
    j = pl.program_id(1)

    @pl.when(j == 0)
    def _():
        vecs = vec_ref[...].astype(jnp.float32)          # (4, h_pad)
        # fc1: [M, I] @ [I, H] -> f32 [M, H]; MXU in operand dtype, f32 acc.
        h = jnp.dot(x_ref[...], w1_ref[...],
                    preferred_element_type=jnp.float32)
        h = h + vecs[0:1, :]                             # b1
        # LeakyReLU (negative_slope = 0.01).
        h = jnp.where(h >= 0, h, neg_slope * h)
        # LayerNorm over the true hid_dim features; padded cols of h are 0, so
        # sum * (1/H) is the exact mean. Mask padded cols out of the variance.
        mu = jnp.sum(h, axis=-1, keepdims=True) * inv_h
        d = h - mu
        if apply_mask:
            d = d * vecs[3:4, :]                         # precomputed 0/1 mask
        var = jnp.sum(d * d, axis=-1, keepdims=True) * inv_h
        hn = d * lax.rsqrt(var + eps)
        hn = hn * vecs[1:2, :] + vecs[2:3, :]            # gamma, beta
        hn_ref[...] = hn.astype(hn_ref.dtype)

    # fc2 (output-column tile j): [M, H] @ [H, tn] -> f32 [M, tn].
    y = jnp.dot(hn_ref[...], w2_ref[...], preferred_element_type=jnp.float32)
    y = y + b2_ref[...].astype(jnp.float32)
    o_ref[...] = y.astype(o_ref.dtype)


def projection_forward(x, params, *, block_rows=None, block_cols=None):
    """x: [..., input_dim] -> [..., hid_dim].

    params = (w1 [hid, in], b1 [hid], w2 [hid, hid], b2 [hid],
              gamma [hid], beta [hid]).
    Pass bf16 x / params for maximum MXU throughput on v5e, v6e and v7x alike
    (accumulation and the LayerNorm epilogue stay in f32 inside the kernel).
    """
    w1, b1, w2, b2, gamma, beta = params
    input_dim = x.shape[-1]
    hid_dim = w1.shape[0]

    lead_shape = x.shape[:-1]
    n = int(np.prod(lead_shape)) if lead_shape else 1
    x2 = x.reshape(n, input_dim)

    # Lane-dense feature layout: pad feature dims to multiples of 128.
    i_pad = _round_up(input_dim, 128)
    h_pad = _round_up(hid_dim, 128)

    itm_x = jnp.dtype(x.dtype).itemsize
    itm_w = jnp.dtype(w1.dtype).itemsize
    # Dtype-aware sublane floor: (8,128) f32, (16,128) bf16, (32,128) 8-bit.
    sublane = {4: 8, 2: 16, 1: 32}.get(itm_x, 8)

    default_rows, vmem_budget, is_v7x = _tpu_config()
    if block_rows is None:
        block_rows = default_rows
    block_rows = min(block_rows, _round_up(n, sublane))
    block_rows = max(sublane, _round_up(block_rows, sublane))
    if is_v7x:
        # 2 TensorCores per chip: keep >= 2 row tiles (when N allows) so the
        # "parallel" row axis can be sharded across both cores.
        cap = max(128, _round_up(_cdiv(n, 2), sublane))
        block_rows = min(block_rows, cap)

    # fc2 output-column tile width (streams W2 when it can't stay resident).
    tn = h_pad if block_cols is None else min(_round_up(block_cols, 128), h_pad)

    def _vmem_needed(br, tn_):
        cols = _cdiv(h_pad, tn_)
        w2_bufs = 1 if cols == 1 else 2            # constant index -> Buffered(1)
        w1_b = i_pad * h_pad * itm_w               # resident, single-buffered
        w2_b = w2_bufs * h_pad * tn_ * itm_w
        small = (8 * h_pad + w2_bufs * 8 * tn_) * itm_w
        x_t = 2 * br * i_pad * itm_x               # double-buffered x tile
        o_t = 2 * br * tn_ * itm_x                 # double-buffered out tile
        hn_s = br * h_pad * itm_w                  # hn VMEM scratch
        interm = 2 * br * h_pad * 4 + br * tn_ * 4  # ~2 live f32 working bufs + y
        return w1_b + w2_b + small + x_t + o_t + hn_s + interm

    # Auto-shrink: prefer streaming W2 columns over cutting the MXU M tile.
    while _vmem_needed(block_rows, tn) > vmem_budget:
        if tn > 512:
            tn = max(512, _round_up(tn // 2, 128))
        elif block_rows > 128:
            block_rows = max(128, _round_up(block_rows // 2, sublane))
        elif tn > 128:
            tn = max(128, _round_up(tn // 2, 128))
        elif block_rows > sublane:
            block_rows = max(sublane, _round_up(block_rows // 2, sublane))
        else:
            # TODO(synk): if W1 alone exceeds the budget (very large dims), add a
            # K-tiled fc1 (third grid axis + f32 accumulator) so W1 streams too.
            break

    grid_cols = _cdiv(h_pad, tn)
    h_out_pad = grid_cols * tn
    n_pad = _round_up(n, block_rows)
    grid_rows = n_pad // block_rows

    if n_pad != n or i_pad != input_dim:
        x2 = jnp.pad(x2, ((0, n_pad - n), (0, i_pad - input_dim)))

    # One-time wrapper transpose to [in, out]: kernel runs plain [M,K]x[K,N]
    # matmuls with no per-step weight transpose on the XLU.
    w1t = jnp.pad(w1.T, ((0, i_pad - input_dim), (0, h_pad - hid_dim)))
    w2t = jnp.pad(w2.T, ((0, h_pad - hid_dim), (0, h_out_pad - hid_dim)))

    def _pad_vec(v):
        return jnp.pad(v, (0, h_pad - hid_dim))

    mask = (jnp.arange(h_pad) < hid_dim).astype(b1.dtype)
    vecs = jnp.stack([_pad_vec(b1), _pad_vec(gamma), _pad_vec(beta), mask], 0)
    b2p = jnp.pad(b2, (0, h_out_pad - hid_dim)).reshape(1, h_out_pad)

    kernel = functools.partial(
        _projection_kernel, eps=1e-6, neg_slope=0.01,
        inv_h=1.0 / hid_dim, apply_mask=(h_pad != hid_dim))

    def _call(single_buffer_resident):
        def _resident(shape, index_map):
            # Constant-index operands: single-buffer to halve resident VMEM.
            if single_buffer_resident:
                try:
                    return pl.BlockSpec(shape, index_map,
                                        pipeline_mode=pl.Buffered(1))
                except TypeError:  # BlockSpec without pipeline_mode support
                    pass
            return pl.BlockSpec(shape, index_map)

        if grid_cols == 1:
            w2_spec = _resident((h_pad, tn), lambda i, j: (0, 0))
            b2_spec = _resident((1, tn), lambda i, j: (0, 0))
        else:
            w2_spec = pl.BlockSpec((h_pad, tn), lambda i, j: (0, j))
            b2_spec = pl.BlockSpec((1, tn), lambda i, j: (0, j))

        return pl.pallas_call(
            kernel,
            out_shape=jax.ShapeDtypeStruct((n_pad, h_out_pad), x.dtype),
            grid=(grid_rows, grid_cols),
            in_specs=[
                pl.BlockSpec((block_rows, i_pad), lambda i, j: (i, 0)),  # x
                _resident((i_pad, h_pad), lambda i, j: (0, 0)),          # W1^T
                _resident((4, h_pad), lambda i, j: (0, 0)),              # b1/g/b/mask
                w2_spec,                                                 # W2^T tile
                b2_spec,                                                 # b2 tile
            ],
            out_specs=pl.BlockSpec((block_rows, tn), lambda i, j: (i, j)),
            scratch_shapes=[pltpu.VMEM((block_rows, h_pad), w2t.dtype)],
            compiler_params=pltpu.CompilerParams(
                dimension_semantics=("parallel", "arbitrary"),
                vmem_limit_bytes=int(vmem_budget)),
        )(x2, w1t, vecs, w2t, b2p)

    try:
        out = _call(True)
    except Exception:  # pragma: no cover - fall back if Buffered(1) unsupported
        out = _call(False)

    out = out[:n, :hid_dim]
    return out.reshape(*lead_shape, hid_dim)


def init_projection_params(key, input_dim, hid_dim, dtype=jnp.float32):
    """Deterministic init mirroring the PyTorch module's _init_weights."""
    k1, k2, k3, k4 = jax.random.split(key, 4)

    def xavier_uniform(k, fan_out, fan_in):
        bound = float(np.sqrt(6.0 / (fan_in + fan_out)))
        return jax.random.uniform(k, (fan_out, fan_in), dtype,
                                  minval=-bound, maxval=bound)

    w1 = xavier_uniform(k1, hid_dim, input_dim)            # fc1.weight [hid, in]
    b1 = 1e-6 * jax.random.normal(k2, (hid_dim,), dtype)   # fc1.bias
    w2 = xavier_uniform(k3, hid_dim, hid_dim)              # fc2.weight [hid, hid]
    b2 = 1e-6 * jax.random.normal(k4, (hid_dim,), dtype)   # fc2.bias
    gamma = jnp.ones((hid_dim,), dtype)                    # layernorm.weight
    beta = jnp.zeros((hid_dim,), dtype)                    # layernorm.bias
    return (w1, b1, w2, b2, gamma, beta)


def projection_ref(x, params):
    """Pure-JAX reference for correctness check."""
    w1, b1, w2, b2, gamma, beta = params
    h = x @ w1.T + b1
    h = jnp.where(h >= 0, h, 0.01 * h)
    mu = jnp.mean(h, axis=-1, keepdims=True)
    var = jnp.mean(jnp.square(h - mu), axis=-1, keepdims=True)
    hn = (h - mu) * lax.rsqrt(var + 1e-6)
    hn = hn * gamma + beta
    return hn @ w2.T + b2


if __name__ == "__main__":
    key = jax.random.PRNGKey(0)
    k_param, k_x, k_param2, k_x2 = jax.random.split(key, 4)

    # Case 1: small dims with feature padding (hid 32 -> h_pad 128), f32 strict.
    batch, seq, input_dim, hid_dim = 2, 8, 32, 32
    params = init_projection_params(k_param, input_dim, hid_dim)
    x = jax.random.normal(k_x, (batch, seq, input_dim), jnp.float32)
    y = jax.block_until_ready(projection_forward(x, params))
    y_ref = projection_ref(x, params)
    np.testing.assert_allclose(np.asarray(y), np.asarray(y_ref),
                               rtol=1e-4, atol=1e-4)
    assert y.shape == (batch, seq, hid_dim)

    # Case 2: bf16 inputs/params (recommended on all generations), loose check.
    params_bf16 = jax.tree_util.tree_map(
        lambda p: p.astype(jnp.bfloat16), params)
    y16 = jax.block_until_ready(
        projection_forward(x.astype(jnp.bfloat16), params_bf16))
    np.testing.assert_allclose(np.asarray(y16).astype(np.float32),
                               np.asarray(y_ref), rtol=1e-1, atol=1e-1)
    assert y16.shape == (batch, seq, hid_dim)

    # Case 3: exercise the W2-column-tiled path (grid_cols > 1, hn scratch reuse).
    input_dim2, hid_dim2 = 64, 256
    params2 = init_projection_params(k_param2, input_dim2, hid_dim2)
    x2 = jax.random.normal(k_x2, (batch, seq, input_dim2), jnp.float32)
    y2 = jax.block_until_ready(
        projection_forward(x2, params2, block_cols=128))
    y2_ref = projection_ref(x2, params2)
    np.testing.assert_allclose(np.asarray(y2), np.asarray(y2_ref),
                               rtol=2e-3, atol=2e-3)
    assert y2.shape == (batch, seq, hid_dim2)

    print("KERNEL_OK")
</pallas_src>

<mosaic_0001>
module attributes {stable_mosaic.version = 11 : i64} {
  func.func @_projection_kernel(%arg0: i32, %arg1: i32, %arg2: memref<16x128xf32, #tpu.memory_space<vmem>>, %arg3: memref<128x128xf32, #tpu.memory_space<vmem>>, %arg4: memref<4x128xf32, #tpu.memory_space<vmem>>, %arg5: memref<128x128xf32, #tpu.memory_space<vmem>>, %arg6: memref<1x128xf32, #tpu.memory_space<vmem>>, %arg7: memref<16x128xf32, #tpu.memory_space<vmem>>, %arg8: memref<16x128xf32, #tpu.memory_space<vmem>>) attributes {dimension_semantics = [#tpu.dimension_semantics<parallel>, #tpu.dimension_semantics<arbitrary>], iteration_bounds = array<i64: 1, 1>, scalar_prefetch = 0 : i64, scratch_operands = 1 : i64, tpu.core_type = #tpu.core_type<tc>, window_params = [{transform_indices = @transform_0, window_bounds = array<i64: 16, 128>}, {pipeline_mode = #tpu.pipeline_mode<synchronous>, transform_indices = @transform_1, window_bounds = array<i64: 128, 128>}, {pipeline_mode = #tpu.pipeline_mode<synchronous>, transform_indices = @transform_2, window_bounds = array<i64: 4, 128>}, {pipeline_mode = #tpu.pipeline_mode<synchronous>, transform_indices = @transform_3, window_bounds = array<i64: 128, 128>}, {pipeline_mode = #tpu.pipeline_mode<synchronous>, transform_indices = @transform_4, window_bounds = array<i64: 1, 128>}, {transform_indices = @transform_5, window_bounds = array<i64: 16, 128>}]} {
    %c0_i32 = arith.constant 0 : i32
    %0 = arith.cmpi eq, %arg1, %c0_i32 : i32
    %1 = arith.extui %0 : i1 to i32
    %c0_i32_0 = arith.constant 0 : i32
    %2 = arith.cmpi ne, %1, %c0_i32_0 : i32
    scf.if %2 {
      %c0_8 = arith.constant 0 : index
      %c0_9 = arith.constant 0 : index
      %10 = vector.load %arg4[%c0_8, %c0_9] : memref<4x128xf32, #tpu.memory_space<vmem>>, vector<4x128xf32>
      %c0_10 = arith.constant 0 : index
      %c0_11 = arith.constant 0 : index
      %11 = vector.load %arg2[%c0_10, %c0_11] : memref<16x128xf32, #tpu.memory_space<vmem>>, vector<16x128xf32>
      %c0_12 = arith.constant 0 : index
      %c0_13 = arith.constant 0 : index
      %12 = vector.load %arg3[%c0_12, %c0_13] : memref<128x128xf32, #tpu.memory_space<vmem>>, vector<128x128xf32>
      %cst_14 = arith.constant dense<0.000000e+00> : vector<16x128xf32>
      %13 = tpu.matmul %11, %12, %cst_14 {dimension_numbers = #tpu.dot_dimension_numbers<[1], [0], [0], [1], [0, 0, 1, 1], [], []>} : vector<16x128xf32>, vector<128x128xf32>, vector<16x128xf32> -> vector<16x128xf32>
      %14 = vector.extract_strided_slice %10 {offsets = [0, 0], sizes = [1, 128], strides = [1, 1]} : vector<4x128xf32> to vector<1x128xf32>
      %15 = vector.broadcast %14 : vector<1x128xf32> to vector<16x128xf32>
      %16 = arith.addf %13, %15 : vector<16x128xf32>
      %cst_15 = arith.constant 0.000000e+00 : f32
      %17 = vector.broadcast %cst_15 : f32 to vector<16x128xf32>
      %18 = arith.cmpf oge, %16, %17 : vector<16x128xf32>
      %cst_16 = arith.constant 0.00999999977 : f32
      %19 = vector.broadcast %cst_16 : f32 to vector<16x128xf32>
      %20 = arith.mulf %19, %16 : vector<16x128xf32>
      %21 = arith.select %18, %16, %20 : vector<16x128xi1>, vector<16x128xf32>
      %cst_17 = arith.constant dense<0.000000e+00> : vector<16xf32>
      %22 = vector.multi_reduction <add>, %21, %cst_17 [1] : vector<16x128xf32> to vector<16xf32>
      %23 = vector.shape_cast %22 : vector<16xf32> to vector<16x1xf32>
      %cst_18 = arith.constant 3.125000e-02 : f32
      %24 = vector.broadcast %cst_18 : f32 to vector<16x1xf32>
      %25 = arith.mulf %23, %24 : vector<16x1xf32>
      %26 = vector.broadcast %25 : vector<16x1xf32> to vector<16x128xf32>
      %27 = arith.subf %21, %26 : vector<16x128xf32>
      %28 = vector.extract_strided_slice %10 {offsets = [3, 0], sizes = [1, 128], strides = [1, 1]} : vector<4x128xf32> to vector<1x128xf32>
      %29 = vector.broadcast %28 : vector<1x128xf32> to vector<16x128xf32>
      %30 = arith.mulf %27, %29 : vector<16x128xf32>
      %31 = arith.mulf %30, %30 : vector<16x128xf32>
      %cst_19 = arith.constant dense<0.000000e+00> : vector<16xf32>
      %32 = vector.multi_reduction <add>, %31, %cst_19 [1] : vector<16x128xf32> to vector<16xf32>
      %33 = vector.shape_cast %32 : vector<16xf32> to vector<16x1xf32>
      %cst_20 = arith.constant 3.125000e-02 : f32
      %34 = vector.broadcast %cst_20 : f32 to vector<16x1xf32>
      %35 = arith.mulf %33, %34 : vector<16x1xf32>
      %cst_21 = arith.constant 9.99999997E-7 : f32
      %36 = vector.broadcast %cst_21 : f32 to vector<16x1xf32>
      %37 = arith.addf %35, %36 : vector<16x1xf32>
      %38 = math.rsqrt %37 : vector<16x1xf32>
      %39 = vector.broadcast %38 : vector<16x1xf32> to vector<16x128xf32>
      %40 = arith.mulf %30, %39 : vector<16x128xf32>
      %41 = vector.extract_strided_slice %10 {offsets = [1, 0], sizes = [1, 128], strides = [1, 1]} : vector<4x128xf32> to vector<1x128xf32>
      %42 = vector.broadcast %41 : vector<1x128xf32> to vector<16x128xf32>
      %43 = arith.mulf %40, %42 : vector<16x128xf32>
      %44 = vector.extract_strided_slice %10 {offsets = [2, 0], sizes = [1, 128], strides = [1, 1]} : vector<4x128xf32> to vector<1x128xf32>
      %45 = vector.broadcast %44 : vector<1x128xf32> to vector<16x128xf32>
      %46 = arith.addf %43, %45 : vector<16x128xf32>
      %c0_22 = arith.constant 0 : index
      %c0_23 = arith.constant 0 : index
      %47 = vector.load %arg8[%c0_22, %c0_23] : memref<16x128xf32, #tpu.memory_space<vmem>>, vector<16x128xf32>
      tpu.vector_store %arg8[%c0_22, %c0_23], %46 {strides = array<i32>} : memref<16x128xf32, #tpu.memory_space<vmem>>, vector<16x128xf32>,
    } else {
    }
    %c0 = arith.constant 0 : index
    %c0_1 = arith.constant 0 : index
    %3 = vector.load %arg8[%c0, %c0_1] : memref<16x128xf32, #tpu.memory_space<vmem>>, vector<16x128xf32>
    %c0_2 = arith.constant 0 : index
    %c0_3 = arith.constant 0 : index
    %4 = vector.load %arg5[%c0_2, %c0_3] : memref<128x128xf32, #tpu.memory_space<vmem>>, vector<128x128xf32>
    %cst = arith.constant dense<0.000000e+00> : vector<16x128xf32>
    %5 = tpu.matmul %3, %4, %cst {dimension_numbers = #tpu.dot_dimension_numbers<[1], [0], [0], [1], [0, 0, 1, 1], [], []>} : vector<16x128xf32>, vector<128x128xf32>, vector<16x128xf32> -> vector<16x128xf32>
    %c0_4 = arith.constant 0 : index
    %c0_5 = arith.constant 0 : index
    %6 = vector.load %arg6[%c0_4, %c0_5] : memref<1x128xf32, #tpu.memory_space<vmem>>, vector<1x128xf32>
    %7 = vector.broadcast %6 : vector<1x128xf32> to vector<16x128xf32>
    %8 = arith.addf %5, %7 : vector<16x128xf32>
    %c0_6 = arith.constant 0 : index
    %c0_7 = arith.constant 0 : index
    %9 = vector.load %arg7[%c0_6, %c0_7] : memref<16x128xf32, #tpu.memory_space<vmem>>, vector<16x128xf32>
    tpu.vector_store %arg7[%c0_6, %c0_7], %8 {strides = array<i32>} : memref<16x128xf32, #tpu.memory_space<vmem>>, vector<16x128xf32>,
    return
  }
  func.func @transform_0(%arg0: i32, %arg1: i32) -> (i32, i32) {
    %c0_i32 = arith.constant 0 : i32
    %c0_i32_0 = arith.constant 0 : i32
    return %arg0, %c0_i32 : i32, i32
  }
  func.func @transform_1(%arg0: i32, %arg1: i32) -> (i32, i32) {
    %c0_i32 = arith.constant 0 : i32
    %c0_i32_0 = arith.constant 0 : i32
    %c0_i32_1 = arith.constant 0 : i32
    return %c0_i32, %c0_i32_0 : i32, i32
  }
  func.func @transform_2(%arg0: i32, %arg1: i32) -> (i32, i32) {
    %c0_i32 = arith.constant 0 : i32
    %c0_i32_0 = arith.constant 0 : i32
    %c0_i32_1 = arith.constant 0 : i32
    return %c0_i32, %c0_i32_0 : i32, i32
  }
  func.func @transform_3(%arg0: i32, %arg1: i32) -> (i32, i32) {
    %c0_i32 = arith.constant 0 : i32
    %c0_i32_0 = arith.constant 0 : i32
    %c0_i32_1 = arith.constant 0 : i32
    return %c0_i32, %c0_i32_0 : i32, i32
  }
  func.func @transform_4(%arg0: i32, %arg1: i32) -> (i32, i32) {
    %c0_i32 = arith.constant 0 : i32
    %c0_i32_0 = arith.constant 0 : i32
    %c0_i32_1 = arith.constant 0 : i32
    return %c0_i32, %c0_i32_0 : i32, i32
  }
  func.func @transform_5(%arg0: i32, %arg1: i32) -> (i32, i32) {
    %c0_i32 = arith.constant 0 : i32
    return %arg0, %arg1 : i32, i32
  }
}

module attributes {stable_mosaic.version = 11 : i64} {
  func.func @_projection_kernel(%arg0: i32, %arg1: i32, %arg2: memref<16x128xf32, #tpu.memory_space<vmem>>, %arg3: memref<128x128xf32, #tpu.memory_space<vmem>>, %arg4: memref<4x128xf32, #tpu.memory_space<vmem>>, %arg5: memref<128x128xf32, #tpu.memory_space<vmem>>, %arg6: memref<1x128xf32, #tpu.memory_space<vmem>>, %arg7: memref<16x128xf32, #tpu.memory_space<vmem>>, %arg8: memref<16x128xf32, #tpu.memory_space<vmem>>) attributes {dimension_semantics = [#tpu.dimension_semantics<parallel>, #tpu.dimension_semantics<arbitrary>], iteration_bounds = array<i64: 1, 1>, scalar_prefetch = 0 : i64, scratch_operands = 1 : i64, tpu.core_type = #tpu.core_type<tc>, window_params = [{transform_indices = @transform_0, window_bounds = array<i64: 16, 128>}, {pipeline_mode = #tpu.pipeline_mode<synchronous>, transform_indices = @transform_1, window_bounds = array<i64: 128, 128>}, {pipeline_mode = #tpu.pipeline_mode<synchronous>, transform_indices = @transform_2, window_bounds = array<i64: 4, 128>}, {pipeline_mode = #tpu.pipeline_mode<synchronous>, transform_indices = @transform_3, window_bounds = array<i64: 128, 128>}, {pipeline_mode = #tpu.pipeline_mode<synchronous>, transform_indices = @transform_4, window_bounds = array<i64: 1, 128>}, {transform_indices = @transform_5, window_bounds = array<i64: 16, 128>}]} {
    %c0_i32 = arith.constant 0 : i32
    %0 = arith.cmpi eq, %arg1, %c0_i32 : i32
    %1 = arith.extui %0 : i1 to i32
    %c0_i32_0 = arith.constant 0 : i32
    %2 = arith.cmpi ne, %1, %c0_i32_0 : i32
    scf.if %2 {
      %c0_8 = arith.constant 0 : index
      %c0_9 = arith.constant 0 : index
      %10 = vector.load %arg4[%c0_8, %c0_9] : memref<4x128xf32, #tpu.memory_space<vmem>>, vector<4x128xf32>
      %c0_10 = arith.constant 0 : index
      %c0_11 = arith.constant 0 : index
      %11 = vector.load %arg2[%c0_10, %c0_11] : memref<16x128xf32, #tpu.memory_space<vmem>>, vector<16x128xf32>
      %c0_12 = arith.constant 0 : index
      %c0_13 = arith.constant 0 : index
      %12 = vector.load %arg3[%c0_12, %c0_13] : memref<128x128xf32, #tpu.memory_space<vmem>>, vector<128x128xf32>
      %cst_14 = arith.constant dense<0.000000e+00> : vector<16x128xf32>
      %13 = tpu.matmul %11, %12, %cst_14 {dimension_numbers = #tpu.dot_dimension_numbers<[1], [0], [0], [1], [0, 0, 1, 1], [], []>} : vector<16x128xf32>, vector<128x128xf32>, vector<16x128xf32> -> vector<16x128xf32>
      %14 = vector.extract_strided_slice %10 {offsets = [0, 0], sizes = [1, 128], strides = [1, 1]} : vector<4x128xf32> to vector<1x128xf32>
      %15 = vector.broadcast %14 : vector<1x128xf32> to vector<16x128xf32>
      %16 = arith.addf %13, %15 : vector<16x128xf32>
      %cst_15 = arith.constant 0.000000e+00 : f32
      %17 = vector.broadcast %cst_15 : f32 to vector<16x128xf32>
      %18 = arith.cmpf oge, %16, %17 : vector<16x128xf32>
      %cst_16 = arith.constant 0.00999999977 : f32
      %19 = vector.broadcast %cst_16 : f32 to vector<16x128xf32>
      %20 = arith.mulf %19, %16 : vector<16x128xf32>
      %21 = arith.select %18, %16, %20 : vector<16x128xi1>, vector<16x128xf32>
      %cst_17 = arith.constant dense<0.000000e+00> : vector<16xf32>
      %22 = vector.multi_reduction <add>, %21, %cst_17 [1] : vector<16x128xf32> to vector<16xf32>
      %23 = vector.shape_cast %22 : vector<16xf32> to vector<16x1xf32>
      %cst_18 = arith.constant 3.125000e-02 : f32
      %24 = vector.broadcast %cst_18 : f32 to vector<16x1xf32>
      %25 = arith.mulf %23, %24 : vector<16x1xf32>
      %26 = vector.broadcast %25 : vector<16x1xf32> to vector<16x128xf32>
      %27 = arith.subf %21, %26 : vector<16x128xf32>
      %28 = vector.extract_strided_slice %10 {offsets = [3, 0], sizes = [1, 128], strides = [1, 1]} : vector<4x128xf32> to vector<1x128xf32>
      %29 = vector.broadcast %28 : vector<1x128xf32> to vector<16x128xf32>
      %30 = arith.mulf %27, %29 : vector<16x128xf32>
      %31 = arith.mulf %30, %30 : vector<16x128xf32>
      %cst_19 = arith.constant dense<0.000000e+00> : vector<16xf32>
      %32 = vector.multi_reduction <add>, %31, %cst_19 [1] : vector<16x128xf32> to vector<16xf32>
      %33 = vector.shape_cast %32 : vector<16xf32> to vector<16x1xf32>
      %cst_20 = arith.constant 3.125000e-02 : f32
      %34 = vector.broadcast %cst_20 : f32 to vector<16x1xf32>
      %35 = arith.mulf %33, %34 : vector<16x1xf32>
      %cst_21 = arith.constant 9.99999997E-7 : f32
      %36 = vector.broadcast %cst_21 : f32 to vector<16x1xf32>
      %37 = arith.addf %35, %36 : vector<16x1xf32>
      %38 = math.rsqrt %37 : vector<16x1xf32>
      %39 = vector.broadcast %38 : vector<16x1xf32> to vector<16x128xf32>
      %40 = arith.mulf %30, %39 : vector<16x128xf32>
      %41 = vector.extract_strided_slice %10 {offsets = [1, 0], sizes = [1, 128], strides = [1, 1]} : vector<4x128xf32> to vector<1x128xf32>
      %42 = vector.broadcast %41 : vector<1x128xf32> to vector<16x128xf32>
      %43 = arith.mulf %40, %42 : vector<16x128xf32>
      %44 = vector.extract_strided_slice %10 {offsets = [2, 0], sizes = [1, 128], strides = [1, 1]} : vector<4x128xf32> to vector<1x128xf32>
      %45 = vector.broadcast %44 : vector<1x128xf32> to vector<16x128xf32>
      %46 = arith.addf %43, %45 : vector<16x128xf32>
      %c0_22 = arith.constant 0 : index
      %c0_23 = arith.constant 0 : index
      %47 = vector.load %arg8[%c0_22, %c0_23] : memref<16x128xf32, #tpu.memory_space<vmem>>, vector<16x128xf32>
      tpu.vector_store %arg8[%c0_22, %c0_23], %46 {strides = array<i32>} : memref<16x128xf32, #tpu.memory_space<vmem>>, vector<16x128xf32>,
    } else {
    }
    %c0 = arith.constant 0 : index
    %c0_1 = arith.constant 0 : index
    %3 = vector.load %arg8[%c0, %c0_1] : memref<16x128xf32, #tpu.memory_space<vmem>>, vector<16x128xf32>
    %c0_2 = arith.constant 0 : index
    %c0_3 = arith.constant 0 : index
    %4 = vector.load %arg5[%c0_2, %c0_3] : memref<128x128xf32, #tpu.memory_space<vmem>>, vector<128x128xf32>
    %cst = arith.constant dense<0.000000e+00> : vector<16x128xf32>
    %5 = tpu.matmul %3, %4, %cst {dimension_numbers = #tpu.dot_dimension_numbers<[1], [0], [0], [1], [0, 0, 1, 1], [], []>} : vector<16x128xf32>, vector<128x128xf32>, vector<16x128xf32> -> vector<16x128xf32>
    %c0_4 = arith.constant 0 : index
    %c0_5 = arith.constant 0 : index
    %6 = vector.load %arg6[%c0_4, %c0_5] : memref<1x128xf32, #tpu.memory_space<vmem>>, vector<1x128xf32>
    %7 = vector.broadcast %6 : vector<1x128xf32> to vector<16x128xf32>
    %8 = arith.addf %5, %7 : vector<16x128xf32>
    %c0_6 = arith.constant 0 : index
    %c0_7 = arith.constant 0 : index
    %9 = vector.load %arg7[%c0_6, %c0_7] : memref<16x128xf32, #tpu.memory_space<vmem>>, vector<16x128xf32>
    tpu.vector_store %arg7[%c0_6, %c0_7], %8 {strides = array<i32>} : memref<16x128xf32, #tpu.memory_space<vmem>>, vector<16x128xf32>,
    return
  }
  func.func @transform_0(%arg0: i32, %arg1: i32) -> (i32, i32) {
    %c0_i32 = arith.constant 0 : i32
    %c0_i32_0 = arith.constant 0 : i32
    return %arg0, %c0_i32 : i32, i32
  }
  func.func @transform_1(%arg0: i32, %arg1: i32) -> (i32, i32) {
    %c0_i32 = arith.constant 0 : i32
    %c0_i32_0 = arith.constant 0 : i32
    %c0_i32_1 = arith.constant 0 : i32
    return %c0_i32, %c0_i32_0 : i32, i32
  }
  func.func @transform_2(%arg0: i32, %arg1: i32) -> (i32, i32) {
    %c0_i32 = arith.constant 0 : i32
    %c0_i32_0 = arith.constant 0 : i32
    %c0_i32_1 = arith.constant 0 : i32
    return %c0_i32, %c0_i32_0 : i32, i32
  }
  func.func @transform_3(%arg0: i32, %arg1: i32) -> (i32, i32) {
    %c0_i32 = arith.constant 0 : i32
    %c0_i32_0 = arith.constant 0 : i32
    %c0_i32_1 = arith.constant 0 : i32
    return %c0_i32, %c0_i32_0 : i32, i32
  }
  func.func @transform_4(%arg0: i32, %arg1: i32) -> (i32, i32) {
    %c0_i32 = arith.constant 0 : i32
    %c0_i32_0 = arith.constant 0 : i32
    %c0_i32_1 = arith.constant 0 : i32
    return %c0_i32, %c0_i32_0 : i32, i32
  }
  func.func @transform_5(%arg0: i32, %arg1: i32) -> (i32, i32) {
    %c0_i32 = arith.constant 0 : i32
    return %arg0, %arg1 : i32, i32
  }
}

</mosaic_0001>

<llo_original>
// kernel: tpu_custom_call.1
$region0: #{tpu_custom_call.1}
  #allocation0 [shape = 'u32[]', space=smem, size = 0x4, offset = 0x4, fixed_abs, tag = 'smem constant byte address 0x4 - core index']
  #allocation1 [shape = 'u32[144,128]{1,0:T(1,128)}', space=vmem, size = 0x12000, scoped, tag = 'internal scratch']
  #allocation2 [shape = 'f32[16,128]{1,0:T(8,128)}', space=vmem, size = 0x2000, scoped, tag = 'scratch operand']
  %s0 = inlined_call_operand.hbm [shape: f32[16,128], index: 0, kind: input, shape index: {}]
  %s1 = inlined_call_operand.hbm [shape: f32[128,128], index: 1, kind: input, shape index: {}]
  %s2 = inlined_call_operand.hbm [shape: f32[4,128], index: 2, kind: input, shape index: {}]
  %s3 = inlined_call_operand.hbm [shape: f32[128,128], index: 3, kind: input, shape index: {}]
  %s4 = inlined_call_operand.vmem [shape: f32[1,128], index: 4, kind: input, shape index: {}]
  %s5 = inlined_call_operand.hbm [shape: f32[16,128], index: 5, kind: output, shape index: {}]
  %s6 = sld [smem:[#allocation0]]
  $region50: #{tpu_custom_call.1} parent=0
    _
  %s8 = ssub.s32 1, %s6
  %s9 = scalar_select 0, %s8, %s6
  $region1: #{tpu_custom_call.1} parent=0
    #allocation3 [shape = 'u8[8192]{0}', space=vmem, size = 0x2000, scoped, tag = 'input window, operand 0, single buffered']
    #allocation4 [shape = 's32[1]{0}', space=sflag, size = 0x4, scoped, tag = 'scoped memory for tpu_custom_call.1']
    #allocation5 [shape = 's32[1]{0}', space=sflag, size = 0x4, scoped, tag = 'scoped memory for tpu_custom_call.1']
    #allocation6 [shape = 'u8[65536]{0}', space=vmem, size = 0x10000, scoped, tag = 'input window, operand 1, single buffered']
    #allocation7 [shape = 's32[1]{0}', space=sflag, size = 0x4, scoped, tag = 'scoped memory for tpu_custom_call.1']
    #allocation8 [shape = 'u8[2048]{0}', space=vmem, size = 0x800, scoped, tag = 'input window, operand 2, single buffered']
    #allocation9 [shape = 'u8[65536]{0}', space=vmem, size = 0x10000, scoped, tag = 'input window, operand 3, single buffered']
    #allocation10 [shape = 's32[1]{0}', space=sflag, size = 0x4, scoped, tag = 'scoped memory for tpu_custom_call.1']
    #allocation11 [shape = 'u8[8192]{0}', space=vmem, size = 0x2000, scoped, tag = 'output window, operand 0, single buffered']
    %10 = vsyncpa [#allocation4], 0
    %11 = vsyncpa [#allocation7], 0
    %12 = vsyncpa [#allocation10], 0
    %13 = vsyncpa [#allocation5], 0
    // Predicated region
    $region2: #{tpu_custom_call.1} parent=1 // pred_check
      _
    $region3: #{tpu_custom_call.1} parent=1 // pred_check_branch
      %15 = sbr.rel (0) target = $region5
    $region4: #{tpu_custom_call.1} parent=1 // pred_region
      %s17 = ssub.s32 256, 256
      %18 = vsyncadd [#allocation4], %s17
      %s19 = sshll.u32 [#allocation3], 4
      %s20 = int_to_ptr.vmem [resolvable:$true] %s19
      %25 = dma.hbm_to_vmem [thread:$0]  %s0, 256, %s20, [#allocation4], 128, 128, 8
    $region5: #{tpu_custom_call.1} parent=1 // pred_fallthru
      _
    // Predicated region
    $region6: #{tpu_custom_call.1} parent=1 // pred_check
      _
    $region7: #{tpu_custom_call.1} parent=1 // pred_check_branch
      %27 = sbr.rel (0) target = $region9
    $region8: #{tpu_custom_call.1} parent=1 // pred_region
      %s29 = ssub.s32 2048, 2048
      %30 = vsyncadd [#allocation7], %s29
      %s31 = sshll.u32 [#allocation6], 4
      %s32 = int_to_ptr.vmem [resolvable:$true] %s31
      %37 = dma.hbm_to_vmem [thread:$0]  %s1, 2048, %s32, [#allocation7], 128, 128, 8
    $region9: #{tpu_custom_call.1} parent=1 // pred_fallthru
      _
    // Predicated region
    $region10: #{tpu_custom_call.1} parent=1 // pred_check
      _
    $region11: #{tpu_custom_call.1} parent=1 // pred_check_branch
      %39 = sbr.rel (0) target = $region13
    $region12: #{tpu_custom_call.1} parent=1 // pred_region
      %s41 = ssub.s32 64, 64
      %42 = vsyncadd [#allocation7], %s41
      %s44 = sshll.u32 [#allocation8], 4
      %s45 = int_to_ptr.vmem [resolvable:$true] %s44
      %47 = dma.hbm_to_vmem [thread:$0]  %s2, 64, %s45, [#allocation7]
    $region13: #{tpu_custom_call.1} parent=1 // pred_fallthru
      _
    // Predicated region
    $region14: #{tpu_custom_call.1} parent=1 // pred_check
      _
    $region15: #{tpu_custom_call.1} parent=1 // pred_check_branch
      %49 = sbr.rel (0) target = $region17
    $region16: #{tpu_custom_call.1} parent=1 // pred_region
      %s51 = ssub.s32 2048, 2048
      %52 = vsyncadd [#allocation10], %s51
      %s53 = sshll.u32 [#allocation9], 4
      %s54 = int_to_ptr.vmem [resolvable:$true] %s53
      %59 = dma.hbm_to_vmem [thread:$0]  %s3, 2048, %s54, [#allocation10], 128, 128, 8
    $region17: #{tpu_custom_call.1} parent=1 // pred_fallthru
      _
    // Predicated region
    $region18: #{tpu_custom_call.1} parent=1 // pred_check
      _
    $region19: #{tpu_custom_call.1} parent=1 // pred_check_branch
      %61 = sbr.rel (0) target = $region21
    $region20: #{tpu_custom_call.1} parent=1 // pred_region
      _
    $region21: #{tpu_custom_call.1} parent=1 // pred_fallthru
      _
    // Predicated region
    $region22: #{tpu_custom_call.1} parent=1 // pred_check
      _
    $region23: #{tpu_custom_call.1} parent=1 // pred_check_branch
      %63 = sbr.rel (0) target = $region25
    $region24: #{tpu_custom_call.1} parent=1 // pred_region
      %64 = dma.done [#allocation4], 256
    $region25: #{tpu_custom_call.1} parent=1 // pred_fallthru
      _
    // Predicated region
    $region26: #{tpu_custom_call.1} parent=1 // pred_check
      _
    $region27: #{tpu_custom_call.1} parent=1 // pred_check_branch
      %66 = sbr.rel (0) target = $region29
    $region28: #{tpu_custom_call.1} parent=1 // pred_region
      %67 = dma.done [#allocation7], 2048
    $region29: #{tpu_custom_call.1} parent=1 // pred_fallthru
      _
    // Predicated region
    $region30: #{tpu_custom_call.1} parent=1 // pred_check
      _
    $region31: #{tpu_custom_call.1} parent=1 // pred_check_branch
      %69 = sbr.rel (0) target = $region33
    $region32: #{tpu_custom_call.1} parent=1 // pred_region
      %70 = dma.done [#allocation7], 64
    $region33: #{tpu_custom_call.1} parent=1 // pred_fallthru
      _
    // Predicated region
    $region34: #{tpu_custom_call.1} parent=1 // pred_check
      _
    $region35: #{tpu_custom_call.1} parent=1 // pred_check_branch
      %72 = sbr.rel (0) target = $region37
    $region36: #{tpu_custom_call.1} parent=1 // pred_region
      %73 = dma.done [#allocation10], 2048
    $region37: #{tpu_custom_call.1} parent=1 // pred_fallthru
      _
    %p74 = scmp.eq.s32.totalorder 0, 0
    // Predicated region
    $region38: #{tpu_custom_call.1} parent=1 // pred_check
      %p75 = pneg %p74
    $region39: #{tpu_custom_call.1} parent=1 // pred_check_branch
      %77 = sbr.rel (%p75) target = $region41
    $region40: #{tpu_custom_call.1} parent=1 // pred_region
      %v78 = vld [vmem:[#allocation8] sm:$0xf]
      %v79 = vld [vmem:[#allocation3] sm:$0xff]
      %v80 = vld [vmem:[#allocation3 + $0x8] sm:$0xff]
      %v81 = vld [vmem:[#allocation6] sm:$0xff]
      %v82 = vld [vmem:[#allocation6 + $0x8] sm:$0xff]
      %v83 = vld [vmem:[#allocation6 + $0x10] sm:$0xff]
      %v84 = vld [vmem:[#allocation6 + $0x18] sm:$0xff]
      %v85 = vld [vmem:[#allocation6 + $0x20] sm:$0xff]
      %v86 = vld [vmem:[#allocation6 + $0x28] sm:$0xff]
      %v87 = vld [vmem:[#allocation6 + $0x30] sm:$0xff]
      %v88 = vld [vmem:[#allocation6 + $0x38] sm:$0xff]
      %v89 = vld [vmem:[#allocation6 + $0x40] sm:$0xff]
      %v90 = vld [vmem:[#allocation6 + $0x48] sm:$0xff]
      %v91 = vld [vmem:[#allocation6 + $0x50] sm:$0xff]
      %v92 = vld [vmem:[#allocation6 + $0x58] sm:$0xff]
      %v93 = vld [vmem:[#allocation6 + $0x60] sm:$0xff]
      %v94 = vld [vmem:[#allocation6 + $0x68] sm:$0xff]
      %v95 = vld [vmem:[#allocation6 + $0x70] sm:$0xff]
      %v96 = vld [vmem:[#allocation6 + $0x78] sm:$0xff]
      %v97 = vlaneseq
      %v98 = vshrl.u32 %v97, 7
      %v99 = vsub.s32 0, %v98
      %v100 = vrot.slane %v78, %v99
      %101 = vmatprep.subr.mxu0 0.0
      %102 = vmatpush1.msra.mxu0 %v96
      %103 = vmatprep.subr.mxu0 0.0
      %104 = vmatpush1.msra.mxu0 %v95
      %105 = vmatprep.subr.mxu0 0.0
      %106 = vmatpush1.msra.mxu0 %v94
      %107 = vmatprep.subr.mxu0 0.0
      %108 = vmatpush1.msra.mxu0 %v93
      %109 = vmatprep.subr.mxu0 0.0
      %110 = vmatpush1.msra.mxu0 %v92
      %111 = vmatprep.subr.mxu0 0.0
      %112 = vmatpush1.msra.mxu0 %v91
      %113 = vmatprep.subr.mxu0 0.0
      %114 = vmatpush1.msra.mxu0 %v90
      %115 = vmatprep.subr.mxu0 0.0
      %116 = vmatpush1.msra.mxu0 %v89
      %117 = vmatprep.subr.mxu0 0.0
      %118 = vmatpush1.msra.mxu0 %v88
      %119 = vmatprep.subr.mxu0 0.0
      %120 = vmatpush1.msra.mxu0 %v87
      %121 = vmatprep.subr.mxu0 0.0
      %122 = vmatpush1.msra.mxu0 %v86
      %123 = vmatprep.subr.mxu0 0.0
      %124 = vmatpush1.msra.mxu0 %v85
      %125 = vmatprep.subr.mxu0 0.0
      %126 = vmatpush1.msra.mxu0 %v84
      %127 = vmatprep.subr.mxu0 0.0
      %128 = vmatpush1.msra.mxu0 %v83
      %129 = vmatprep.subr.mxu0 0.0
      %130 = vmatpush1.msra.mxu0 %v82
      %131 = vmatprep.subr.mxu0 0.0
      %132 = vmatpush1.msra.mxu0 %v81
      %133 = vmatprep.subr.mxu0 0.0
      %134 = vmatpush2.msra.mxu0 0.0
      %135 = vmatprep.subr.mxu0 0.0
      %136 = vmatpush2.msra.mxu0 0.0
      %137 = vmatprep.subr.mxu0 0.0
      %138 = vmatpush2.msra.mxu0 0.0
      %139 = vmatprep.subr.mxu0 0.0
      %140 = vmatpush2.msra.mxu0 0.0
      %141 = vmatprep.subr.mxu0 0.0
      %142 = vmatpush2.msra.mxu0 0.0
      %143 = vmatprep.subr.mxu0 0.0
      %144 = vmatpush2.msra.mxu0 0.0
      %145 = vmatprep.subr.mxu0 0.0
      %146 = vmatpush2.msra.mxu0 0.0
      %147 = vmatprep.subr.mxu0 0.0
      %148 = vmatpush2.msra.mxu0 0.0
      %149 = vmatprep.subr.mxu0 0.0
      %150 = vmatpush2.msra.mxu0 0.0
      %151 = vmatprep.subr.mxu0 0.0
      %152 = vmatpush2.msra.mxu0 0.0
      %153 = vmatprep.subr.mxu0 0.0
      %154 = vmatpush2.msra.mxu0 0.0
      %155 = vmatprep.subr.mxu0 0.0
      %156 = vmatpush2.msra.mxu0 0.0
      %157 = vmatprep.subr.mxu0 0.0
      %158 = vmatpush2.msra.mxu0 0.0
      %159 = vmatprep.subr.mxu0 0.0
      %160 = vmatpush2.msra.mxu0 0.0
      %161 = vmatprep.subr.mxu0 0.0
      %162 = vmatpush2.msra.mxu0 0.0
      %163 = vmatprep.subr.mxu0 0.0
      %164 = vmatpush2.msra.mxu0 0.0
      %165 = vmatprep.mubr.f32.mxu0 0.0
      %166 = vmatmul.mubr.f32.gmra.mxu0 %v79
      %v167 = vpop.f32.mrf.mxu0
      %v168 = vadd.f32 %v100, %v167
      %v169 = vpop.f32.mrf.mxu0
      %170 = vmatprep.mubr.f32.mxu0 0.0
      %171 = vmatmul.mubr.f32.gmra.mxu0 %v80
      %v172 = vpop.f32.mrf.mxu0
      %v173 = vadd.f32 %v100, %v172
      %v174 = vpop.f32.mrf.mxu0
      %175 = vdwg.mxu0
      %vm176 = vcmp.ge.f32.partialorder %v168, 0.0
      %vm177 = vcmp.ge.f32.partialorder %v173, 0.0
      %v178 = vmul.f32 %v168, 0.01
      %v179 = vmul.f32 %v173, 0.01
      %v180 = vsel %vm176, %v168, %v178
      %v181 = vsel %vm177, %v173, %v179
      %182 = vadd.xlane.f32.xlu0 %v180
      %v183 = vpop.xlane.xlu0 %182
      %184 = vadd.xlane.f32.xlu0 %v181
      %v185 = vpop.xlane.xlu0 %184
      %v186 = vmul.f32 %v183, 0.03125
      %v187 = vmul.f32 %v185, 0.03125
      %v188 = vsub.f32 %v180, %v186
      %v189 = vsub.f32 %v181, %v187
      %v190 = vlaneseq
      %v191 = vshrl.u32 %v190, 7
      %v192 = vsub.s32 3, %v191
      %v193 = vrot.slane %v78, %v192
      %v194 = vmul.f32 %v188, %v193
      %v195 = vmul.f32 %v189, %v193
      %v196 = vmul.f32 %v194, %v194
      %v197 = vmul.f32 %v195, %v195
      %198 = vadd.xlane.f32.xlu0 %v196
      %v199 = vpop.xlane.xlu0 %198
      %200 = vadd.xlane.f32.xlu0 %v197
      %v201 = vpop.xlane.xlu0 %200
      %v202 = vmul.f32 %v199, 0.03125
      %v203 = vmul.f32 %v201, 0.03125
      %v204 = vadd.f32 %v202, 1e-06
      %v205 = vadd.f32 %v203, 1e-06
      %v206 = vrsqrt.pop %v204
      %v207 = vrsqrt.pop %v205
      %v208 = vmul.f32 %v194, %v206
      %v209 = vmul.f32 %v195, %v207
      %v210 = vlaneseq
      %v211 = vshrl.u32 %v210, 7
      %v212 = vsub.s32 1, %v211
      %v213 = vrot.slane %v78, %v212
      %v214 = vmul.f32 %v208, %v213
      %v215 = vmul.f32 %v209, %v213
      %v216 = vlaneseq
      %v217 = vshrl.u32 %v216, 7
      %v218 = vsub.s32 2, %v217
      %v219 = vrot.slane %v78, %v218
      %v220 = vadd.f32 %v214, %v219
      %v221 = vadd.f32 %v215, %v219
      %222 = vst [vmem:[#allocation2] sm:$0xff] %v220
      %223 = vst [vmem:[#allocation2 + $0x8] sm:$0xff] %v221
    $region41: #{tpu_custom_call.1} parent=1 // pred_fallthru
      _
    %v224 = vld [vmem:[#allocation2] sm:$0xff]
    %v225 = vld [vmem:[#allocation2 + $0x8] sm:$0xff]
    %v226 = vld [vmem:[#allocation9] sm:$0xff]
    %v227 = vld [vmem:[#allocation9 + $0x8] sm:$0xff]
    %v228 = vld [vmem:[#allocation9 + $0x10] sm:$0xff]
    %v229 = vld [vmem:[#allocation9 + $0x18] sm:$0xff]
    %v230 = vld [vmem:[#allocation9 + $0x20] sm:$0xff]
    %v231 = vld [vmem:[#allocation9 + $0x28] sm:$0xff]
    %v232 = vld [vmem:[#allocation9 + $0x30] sm:$0xff]
    %v233 = vld [vmem:[#allocation9 + $0x38] sm:$0xff]
    %v234 = vld [vmem:[#allocation9 + $0x40] sm:$0xff]
    %v235 = vld [vmem:[#allocation9 + $0x48] sm:$0xff]
    %v236 = vld [vmem:[#allocation9 + $0x50] sm:$0xff]
    %v237 = vld [vmem:[#allocation9 + $0x58] sm:$0xff]
    %v238 = vld [vmem:[#allocation9 + $0x60] sm:$0xff]
    %v239 = vld [vmem:[#allocation9 + $0x68] sm:$0xff]
    %v240 = vld [vmem:[#allocation9 + $0x70] sm:$0xff]
    %v241 = vld [vmem:[#allocation9 + $0x78] sm:$0xff]
    %v242 = vld [vmem:[%s4] sm:$0x1]
    %v244 = vlaneseq
    %v245 = vshrl.u32 %v244, 7
    %v246 = vsub.s32 0, %v245
    %v247 = vrot.slane %v242, %v246
    %249 = vmatprep.subr.mxu0 0.0
    %250 = vmatpush1.msra.mxu0 %v241
    %251 = vmatprep.subr.mxu0 0.0
    %252 = vmatpush1.msra.mxu0 %v240
    %253 = vmatprep.subr.mxu0 0.0
    %254 = vmatpush1.msra.mxu0 %v239
    %255 = vmatprep.subr.mxu0 0.0
    %256 = vmatpush1.msra.mxu0 %v238
    %257 = vmatprep.subr.mxu0 0.0
    %258 = vmatpush1.msra.mxu0 %v237
    %259 = vmatprep.subr.mxu0 0.0
    %260 = vmatpush1.msra.mxu0 %v236
    %261 = vmatprep.subr.mxu0 0.0
    %262 = vmatpush1.msra.mxu0 %v235
    %263 = vmatprep.subr.mxu0 0.0
    %264 = vmatpush1.msra.mxu0 %v234
    %265 = vmatprep.subr.mxu0 0.0
    %266 = vmatpush1.msra.mxu0 %v233
    %267 = vmatprep.subr.mxu0 0.0
    %268 = vmatpush1.msra.mxu0 %v232
    %269 = vmatprep.subr.mxu0 0.0
    %270 = vmatpush1.msra.mxu0 %v231
    %271 = vmatprep.subr.mxu0 0.0
    %272 = vmatpush1.msra.mxu0 %v230
    %273 = vmatprep.subr.mxu0 0.0
    %274 = vmatpush1.msra.mxu0 %v229
    %275 = vmatprep.subr.mxu0 0.0
    %276 = vmatpush1.msra.mxu0 %v228
    %277 = vmatprep.subr.mxu0 0.0
    %278 = vmatpush1.msra.mxu0 %v227
    %279 = vmatprep.subr.mxu0 0.0
    %280 = vmatpush1.msra.mxu0 %v226
    %281 = vmatprep.subr.mxu0 0.0
    %282 = vmatpush2.msra.mxu0 0.0
    %283 = vmatprep.subr.mxu0 0.0
    %284 = vmatpush2.msra.mxu0 0.0
    %285 = vmatprep.subr.mxu0 0.0
    %286 = vmatpush2.msra.mxu0 0.0
    %287 = vmatprep.subr.mxu0 0.0
    %288 = vmatpush2.msra.mxu0 0.0
    %289 = vmatprep.subr.mxu0 0.0
    %290 = vmatpush2.msra.mxu0 0.0
    %291 = vmatprep.subr.mxu0 0.0
    %292 = vmatpush2.msra.mxu0 0.0
    %293 = vmatprep.subr.mxu0 0.0
    %294 = vmatpush2.msra.mxu0 0.0
    %295 = vmatprep.subr.mxu0 0.0
    %296 = vmatpush2.msra.mxu0 0.0
    %297 = vmatprep.subr.mxu0 0.0
    %298 = vmatpush2.msra.mxu0 0.0
    %299 = vmatprep.subr.mxu0 0.0
    %300 = vmatpush2.msra.mxu0 0.0
    %301 = vmatprep.subr.mxu0 0.0
    %302 = vmatpush2.msra.mxu0 0.0
    %303 = vmatprep.subr.mxu0 0.0
    %304 = vmatpush2.msra.mxu0 0.0
    %305 = vmatprep.subr.mxu0 0.0
    %306 = vmatpush2.msra.mxu0 0.0
    %307 = vmatprep.subr.mxu0 0.0
    %308 = vmatpush2.msra.mxu0 0.0
    %309 = vmatprep.subr.mxu0 0.0
    %310 = vmatpush2.msra.mxu0 0.0
    %311 = vmatprep.subr.mxu0 0.0
    %312 = vmatpush2.msra.mxu0 0.0
    %313 = vmatprep.mubr.f32.mxu0 0.0
    %314 = vmatmul.mubr.f32.gmra.mxu0 %v224
    %v315 = vpop.f32.mrf.mxu0
    %v316 = vadd.f32 %v247, %v315
    %v317 = vpop.f32.mrf.mxu0
    %318 = vmatprep.mubr.f32.mxu0 0.0
    %319 = vmatmul.mubr.f32.gmra.mxu0 %v225
    %v320 = vpop.f32.mrf.mxu0
    %v321 = vadd.f32 %v247, %v320
    %v322 = vpop.f32.mrf.mxu0
    %323 = vdwg.mxu0
    %324 = vst [vmem:[#allocation11] sm:$0xff] %v316
    %325 = vst [vmem:[#allocation11 + $0x8] sm:$0xff] %v321
    // Predicated region
    $region42: #{tpu_custom_call.1} parent=1 // pred_check
      _
    $region43: #{tpu_custom_call.1} parent=1 // pred_check_branch
      %327 = sbr.rel (0) target = $region45
    $region44: #{tpu_custom_call.1} parent=1 // pred_region
      %s329 = ssub.s32 256, 256
      %330 = vsyncadd [#allocation5], %s329
      %s331 = sshll.u32 [#allocation11], 4
      %s332 = int_to_ptr.vmem [resolvable:$true] %s331
      %337 = dma.vmem_to_hbm [thread:$0]  %s332, 256, %s5, [#allocation5], 128, 128, 8
    $region45: #{tpu_custom_call.1} parent=1 // pred_fallthru
      _
    // Predicated region
    $region46: #{tpu_custom_call.1} parent=1 // pred_check
      _
    $region47: #{tpu_custom_call.1} parent=1 // pred_check_branch
      %339 = sbr.rel (0) target = $region49
    $region48: #{tpu_custom_call.1} parent=1 // pred_region
      %340 = dma.done [#allocation5], 256
    $region49: #{tpu_custom_call.1} parent=1 // pred_fallthru
      _
    %341 = vsyncpa [#allocation4], 1
    %342 = vsyncpa [#allocation7], 1
    %343 = vsyncpa [#allocation10], 1
    %344 = vsyncpa [#allocation5], 1

// kernel: tpu_custom_call.1
$region0: #{tpu_custom_call.1}
  #allocation0 [shape = 'u32[]', space=smem, size = 0x4, offset = 0x4, fixed_abs, tag = 'smem constant byte address 0x4 - core index']
  #allocation1 [shape = 'u32[144,128]{1,0:T(1,128)}', space=vmem, size = 0x12000, scoped, tag = 'internal scratch']
  #allocation2 [shape = 'f32[16,128]{1,0:T(8,128)}', space=vmem, size = 0x2000, scoped, tag = 'scratch operand']
  %s0 = inlined_call_operand.hbm [shape: f32[16,128], index: 0, kind: input, shape index: {}]
  %s1 = inlined_call_operand.hbm [shape: f32[128,128], index: 1, kind: input, shape index: {}]
  %s2 = inlined_call_operand.hbm [shape: f32[4,128], index: 2, kind: input, shape index: {}]
  %s3 = inlined_call_operand.hbm [shape: f32[128,128], index: 3, kind: input, shape index: {}]
  %s4 = inlined_call_operand.vmem [shape: f32[1,128], index: 4, kind: input, shape index: {}]
  %s5 = inlined_call_operand.hbm [shape: f32[16,128], index: 5, kind: output, shape index: {}]
  %s6 = sld [smem:[#allocation0]]
  $region50: #{tpu_custom_call.1} parent=0
    _
  %s8 = ssub.s32 1, %s6
  %s9 = scalar_select 0, %s8, %s6
  $region1: #{tpu_custom_call.1} parent=0
    #allocation3 [shape = 'u8[8192]{0}', space=vmem, size = 0x2000, scoped, tag = 'input window, operand 0, single buffered']
    #allocation4 [shape = 's32[1]{0}', space=sflag, size = 0x4, scoped, tag = 'scoped memory for tpu_custom_call.1']
    #allocation5 [shape = 's32[1]{0}', space=sflag, size = 0x4, scoped, tag = 'scoped memory for tpu_custom_call.1']
    #allocation6 [shape = 'u8[65536]{0}', space=vmem, size = 0x10000, scoped, tag = 'input window, operand 1, single buffered']
    #allocation7 [shape = 's32[1]{0}', space=sflag, size = 0x4, scoped, tag = 'scoped memory for tpu_custom_call.1']
    #allocation8 [shape = 'u8[2048]{0}', space=vmem, size = 0x800, scoped, tag = 'input window, operand 2, single buffered']
    #allocation9 [shape = 'u8[65536]{0}', space=vmem, size = 0x10000, scoped, tag = 'input window, operand 3, single buffered']
    #allocation10 [shape = 's32[1]{0}', space=sflag, size = 0x4, scoped, tag = 'scoped memory for tpu_custom_call.1']
    #allocation11 [shape = 'u8[8192]{0}', space=vmem, size = 0x2000, scoped, tag = 'output window, operand 0, single buffered']
    %10 = vsyncpa [#allocation4], 0
    %11 = vsyncpa [#allocation7], 0
    %12 = vsyncpa [#allocation10], 0
    %13 = vsyncpa [#allocation5], 0
    // Predicated region
    $region2: #{tpu_custom_call.1} parent=1 // pred_check
      _
    $region3: #{tpu_custom_call.1} parent=1 // pred_check_branch
      %15 = sbr.rel (0) target = $region5
    $region4: #{tpu_custom_call.1} parent=1 // pred_region
      %s17 = ssub.s32 256, 256
      %18 = vsyncadd [#allocation4], %s17
      %s19 = sshll.u32 [#allocation3], 4
      %s20 = int_to_ptr.vmem [resolvable:$true] %s19
      %25 = dma.hbm_to_vmem [thread:$0]  %s0, 256, %s20, [#allocation4], 128, 128, 8
    $region5: #{tpu_custom_call.1} parent=1 // pred_fallthru
      _
    // Predicated region
    $region6: #{tpu_custom_call.1} parent=1 // pred_check
      _
    $region7: #{tpu_custom_call.1} parent=1 // pred_check_branch
      %27 = sbr.rel (0) target = $region9
    $region8: #{tpu_custom_call.1} parent=1 // pred_region
      %s29 = ssub.s32 2048, 2048
      %30 = vsyncadd [#allocation7], %s29
      %s31 = sshll.u32 [#allocation6], 4
      %s32 = int_to_ptr.vmem [resolvable:$true] %s31
      %37 = dma.hbm_to_vmem [thread:$0]  %s1, 2048, %s32, [#allocation7], 128, 128, 8
    $region9: #{tpu_custom_call.1} parent=1 // pred_fallthru
      _
    // Predicated region
    $region10: #{tpu_custom_call.1} parent=1 // pred_check
      _
    $region11: #{tpu_custom_call.1} parent=1 // pred_check_branch
      %39 = sbr.rel (0) target = $region13
    $region12: #{tpu_custom_call.1} parent=1 // pred_region
      %s41 = ssub.s32 64, 64
      %42 = vsyncadd [#allocation7], %s41
      %s44 = sshll.u32 [#allocation8], 4
      %s45 = int_to_ptr.vmem [resolvable:$true] %s44
      %47 = dma.hbm_to_vmem [thread:$0]  %s2, 64, %s45, [#allocation7]
    $region13: #{tpu_custom_call.1} parent=1 // pred_fallthru
      _
    // Predicated region
    $region14: #{tpu_custom_call.1} parent=1 // pred_check
      _
    $region15: #{tpu_custom_call.1} parent=1 // pred_check_branch
      %49 = sbr.rel (0) target = $region17
    $region16: #{tpu_custom_call.1} parent=1 // pred_region
      %s51 = ssub.s32 2048, 2048
      %52 = vsyncadd [#allocation10], %s51
      %s53 = sshll.u32 [#allocation9], 4
      %s54 = int_to_ptr.vmem [resolvable:$true] %s53
      %59 = dma.hbm_to_vmem [thread:$0]  %s3, 2048, %s54, [#allocation10], 128, 128, 8
    $region17: #{tpu_custom_call.1} parent=1 // pred_fallthru
      _
    // Predicated region
    $region18: #{tpu_custom_call.1} parent=1 // pred_check
      _
    $region19: #{tpu_custom_call.1} parent=1 // pred_check_branch
      %61 = sbr.rel (0) target = $region21
    $region20: #{tpu_custom_call.1} parent=1 // pred_region
      _
    $region21: #{tpu_custom_call.1} parent=1 // pred_fallthru
      _
    // Predicated region
    $region22: #{tpu_custom_call.1} parent=1 // pred_check
      _
    $region23: #{tpu_custom_call.1} parent=1 // pred_check_branch
      %63 = sbr.rel (0) target = $region25
    $region24: #{tpu_custom_call.1} parent=1 // pred_region
      %64 = dma.done [#allocation4], 256
    $region25: #{tpu_custom_call.1} parent=1 // pred_fallthru
      _
    // Predicated region
    $region26: #{tpu_custom_call.1} parent=1 // pred_check
      _
    $region27: #{tpu_custom_call.1} parent=1 // pred_check_branch
      %66 = sbr.rel (0) target = $region29
    $region28: #{tpu_custom_call.1} parent=1 // pred_region
      %67 = dma.done [#allocation7], 2048
    $region29: #{tpu_custom_call.1} parent=1 // pred_fallthru
      _
    // Predicated region
    $region30: #{tpu_custom_call.1} parent=1 // pred_check
      _
    $region31: #{tpu_custom_call.1} parent=1 // pred_check_branch
      %69 = sbr.rel (0) target = $region33
    $region32: #{tpu_custom_call.1} parent=1 // pred_region
      %70 = dma.done [#allocation7], 64
    $region33: #{tpu_custom_call.1} parent=1 // pred_fallthru
      _
    // Predicated region
    $region34: #{tpu_custom_call.1} parent=1 // pred_check
      _
    $region35: #{tpu_custom_call.1} parent=1 // pred_check_branch
      %72 = sbr.rel (0) target = $region37
    $region36: #{tpu_custom_call.1} parent=1 // pred_region
      %73 = dma.done [#allocation10], 2048
    $region37: #{tpu_custom_call.1} parent=1 // pred_fallthru
      _
    %p74 = scmp.eq.s32.totalorder 0, 0
    // Predicated region
    $region38: #{tpu_custom_call.1} parent=1 // pred_check
      %p75 = pneg %p74
    $region39: #{tpu_custom_call.1} parent=1 // pred_check_branch
      %77 = sbr.rel (%p75) target = $region41
    $region40: #{tpu_custom_call.1} parent=1 // pred_region
      %v78 = vld [vmem:[#allocation8] sm:$0xf]
      %v79 = vld [vmem:[#allocation3] sm:$0xff]
      %v80 = vld [vmem:[#allocation3 + $0x8] sm:$0xff]
      %v81 = vld [vmem:[#allocation6] sm:$0xff]
      %v82 = vld [vmem:[#allocation6 + $0x8] sm:$0xff]
      %v83 = vld [vmem:[#allocation6 + $0x10] sm:$0xff]
      %v84 = vld [vmem:[#allocation6 + $0x18] sm:$0xff]
      %v85 = vld [vmem:[#allocation6 + $0x20] sm:$0xff]
      %v86 = vld [vmem:[#allocation6 + $0x28] sm:$0xff]
      %v87 = vld [vmem:[#allocation6 + $0x30] sm:$0xff]
      %v88 = vld [vmem:[#allocation6 + $0x38] sm:$0xff]
      %v89 = vld [vmem:[#allocation6 + $0x40] sm:$0xff]
      %v90 = vld [vmem:[#allocation6 + $0x48] sm:$0xff]
      %v91 = vld [vmem:[#allocation6 + $0x50] sm:$0xff]
      %v92 = vld [vmem:[#allocation6 + $0x58] sm:$0xff]
      %v93 = vld [vmem:[#allocation6 + $0x60] sm:$0xff]
      %v94 = vld [vmem:[#allocation6 + $0x68] sm:$0xff]
      %v95 = vld [vmem:[#allocation6 + $0x70] sm:$0xff]
      %v96 = vld [vmem:[#allocation6 + $0x78] sm:$0xff]
      %v97 = vlaneseq
      %v98 = vshrl.u32 %v97, 7
      %v99 = vsub.s32 0, %v98
      %v100 = vrot.slane %v78, %v99
      %101 = vmatprep.subr.mxu0 0.0
      %102 = vmatpush1.msra.mxu0 %v96
      %103 = vmatprep.subr.mxu0 0.0
      %104 = vmatpush1.msra.mxu0 %v95
      %105 = vmatprep.subr.mxu0 0.0
      %106 = vmatpush1.msra.mxu0 %v94
      %107 = vmatprep.subr.mxu0 0.0
      %108 = vmatpush1.msra.mxu0 %v93
      %109 = vmatprep.subr.mxu0 0.0
      %110 = vmatpush1.msra.mxu0 %v92
      %111 = vmatprep.subr.mxu0 0.0
      %112 = vmatpush1.msra.mxu0 %v91
      %113 = vmatprep.subr.mxu0 0.0
      %114 = vmatpush1.msra.mxu0 %v90
      %115 = vmatprep.subr.mxu0 0.0
      %116 = vmatpush1.msra.mxu0 %v89
      %117 = vmatprep.subr.mxu0 0.0
      %118 = vmatpush1.msra.mxu0 %v88
      %119 = vmatprep.subr.mxu0 0.0
      %120 = vmatpush1.msra.mxu0 %v87
      %121 = vmatprep.subr.mxu0 0.0
      %122 = vmatpush1.msra.mxu0 %v86
      %123 = vmatprep.subr.mxu0 0.0
      %124 = vmatpush1.msra.mxu0 %v85
      %125 = vmatprep.subr.mxu0 0.0
      %126 = vmatpush1.msra.mxu0 %v84
      %127 = vmatprep.subr.mxu0 0.0
      %128 = vmatpush1.msra.mxu0 %v83
      %129 = vmatprep.subr.mxu0 0.0
      %130 = vmatpush1.msra.mxu0 %v82
      %131 = vmatprep.subr.mxu0 0.0
      %132 = vmatpush1.msra.mxu0 %v81
      %133 = vmatprep.subr.mxu0 0.0
      %134 = vmatpush2.msra.mxu0 0.0
      %135 = vmatprep.subr.mxu0 0.0
      %136 = vmatpush2.msra.mxu0 0.0
      %137 = vmatprep.subr.mxu0 0.0
      %138 = vmatpush2.msra.mxu0 0.0
      %139 = vmatprep.subr.mxu0 0.0
      %140 = vmatpush2.msra.mxu0 0.0
      %141 = vmatprep.subr.mxu0 0.0
      %142 = vmatpush2.msra.mxu0 0.0
      %143 = vmatprep.subr.mxu0 0.0
      %144 = vmatpush2.msra.mxu0 0.0
      %145 = vmatprep.subr.mxu0 0.0
      %146 = vmatpush2.msra.mxu0 0.0
      %147 = vmatprep.subr.mxu0 0.0
      %148 = vmatpush2.msra.mxu0 0.0
      %149 = vmatprep.subr.mxu0 0.0
      %150 = vmatpush2.msra.mxu0 0.0
      %151 = vmatprep.subr.mxu0 0.0
      %152 = vmatpush2.msra.mxu0 0.0
      %153 = vmatprep.subr.mxu0 0.0
      %154 = vmatpush2.msra.mxu0 0.0
      %155 = vmatprep.subr.mxu0 0.0
      %156 = vmatpush2.msra.mxu0 0.0
      %157 = vmatprep.subr.mxu0 0.0
      %158 = vmatpush2.msra.mxu0 0.0
      %159 = vmatprep.subr.mxu0 0.0
      %160 = vmatpush2.msra.mxu0 0.0
      %161 = vmatprep.subr.mxu0 0.0
      %162 = vmatpush2.msra.mxu0 0.0
      %163 = vmatprep.subr.mxu0 0.0
      %164 = vmatpush2.msra.mxu0 0.0
      %165 = vmatprep.mubr.f32.mxu0 0.0
      %166 = vmatmul.mubr.f32.gmra.mxu0 %v79
      %v167 = vpop.f32.mrf.mxu0
      %v168 = vadd.f32 %v100, %v167
      %v169 = vpop.f32.mrf.mxu0
      %170 = vmatprep.mubr.f32.mxu0 0.0
      %171 = vmatmul.mubr.f32.gmra.mxu0 %v80
      %v172 = vpop.f32.mrf.mxu0
      %v173 = vadd.f32 %v100, %v172
      %v174 = vpop.f32.mrf.mxu0
      %175 = vdwg.mxu0
      %vm176 = vcmp.ge.f32.partialorder %v168, 0.0
      %vm177 = vcmp.ge.f32.partialorder %v173, 0.0
      %v178 = vmul.f32 %v168, 0.01
      %v179 = vmul.f32 %v173, 0.01
      %v180 = vsel %vm176, %v168, %v178
      %v181 = vsel %vm177, %v173, %v179
      %182 = vadd.xlane.f32.xlu0 %v180
      %v183 = vpop.xlane.xlu0 %182
      %184 = vadd.xlane.f32.xlu0 %v181
      %v185 = vpop.xlane.xlu0 %184
      %v186 = vmul.f32 %v183, 0.03125
      %v187 = vmul.f32 %v185, 0.03125
      %v188 = vsub.f32 %v180, %v186
      %v189 = vsub.f32 %v181, %v187
      %v190 = vlaneseq
      %v191 = vshrl.u32 %v190, 7
      %v192 = vsub.s32 3, %v191
      %v193 = vrot.slane %v78, %v192
      %v194 = vmul.f32 %v188, %v193
      %v195 = vmul.f32 %v189, %v193
      %v196 = vmul.f32 %v194, %v194
      %v197 = vmul.f32 %v195, %v195
      %198 = vadd.xlane.f32.xlu0 %v196
      %v199 = vpop.xlane.xlu0 %198
      %200 = vadd.xlane.f32.xlu0 %v197
      %v201 = vpop.xlane.xlu0 %200
      %v202 = vmul.f32 %v199, 0.03125
      %v203 = vmul.f32 %v201, 0.03125
      %v204 = vadd.f32 %v202, 1e-06
      %v205 = vadd.f32 %v203, 1e-06
      %v206 = vrsqrt.pop %v204
      %v207 = vrsqrt.pop %v205
      %v208 = vmul.f32 %v194, %v206
      %v209 = vmul.f32 %v195, %v207
      %v210 = vlaneseq
      %v211 = vshrl.u32 %v210, 7
      %v212 = vsub.s32 1, %v211
      %v213 = vrot.slane %v78, %v212
      %v214 = vmul.f32 %v208, %v213
      %v215 = vmul.f32 %v209, %v213
      %v216 = vlaneseq
      %v217 = vshrl.u32 %v216, 7
      %v218 = vsub.s32 2, %v217
      %v219 = vrot.slane %v78, %v218
      %v220 = vadd.f32 %v214, %v219
      %v221 = vadd.f32 %v215, %v219
      %222 = vst [vmem:[#allocation2] sm:$0xff] %v220
      %223 = vst [vmem:[#allocation2 + $0x8] sm:$0xff] %v221
    $region41: #{tpu_custom_call.1} parent=1 // pred_fallthru
      _
    %v224 = vld [vmem:[#allocation2] sm:$0xff]
    %v225 = vld [vmem:[#allocation2 + $0x8] sm:$0xff]
    %v226 = vld [vmem:[#allocation9] sm:$0xff]
    %v227 = vld [vmem:[#allocation9 + $0x8] sm:$0xff]
    %v228 = vld [vmem:[#allocation9 + $0x10] sm:$0xff]
    %v229 = vld [vmem:[#allocation9 + $0x18] sm:$0xff]
    %v230 = vld [vmem:[#allocation9 + $0x20] sm:$0xff]
    %v231 = vld [vmem:[#allocation9 + $0x28] sm:$0xff]
    %v232 = vld [vmem:[#allocation9 + $0x30] sm:$0xff]
    %v233 = vld [vmem:[#allocation9 + $0x38] sm:$0xff]
    %v234 = vld [vmem:[#allocation9 + $0x40] sm:$0xff]
    %v235 = vld [vmem:[#allocation9 + $0x48] sm:$0xff]
    %v236 = vld [vmem:[#allocation9 + $0x50] sm:$0xff]
    %v237 = vld [vmem:[#allocation9 + $0x58] sm:$0xff]
    %v238 = vld [vmem:[#allocation9 + $0x60] sm:$0xff]
    %v239 = vld [vmem:[#allocation9 + $0x68] sm:$0xff]
    %v240 = vld [vmem:[#allocation9 + $0x70] sm:$0xff]
    %v241 = vld [vmem:[#allocation9 + $0x78] sm:$0xff]
    %v242 = vld [vmem:[%s4] sm:$0x1]
    %v244 = vlaneseq
    %v245 = vshrl.u32 %v244, 7
    %v246 = vsub.s32 0, %v245
    %v247 = vrot.slane %v242, %v246
    %249 = vmatprep.subr.mxu0 0.0
    %250 = vmatpush1.msra.mxu0 %v241
    %251 = vmatprep.subr.mxu0 0.0
    %252 = vmatpush1.msra.mxu0 %v240
    %253 = vmatprep.subr.mxu0 0.0
    %254 = vmatpush1.msra.mxu0 %v239
    %255 = vmatprep.subr.mxu0 0.0
    %256 = vmatpush1.msra.mxu0 %v238
    %257 = vmatprep.subr.mxu0 0.0
    %258 = vmatpush1.msra.mxu0 %v237
    %259 = vmatprep.subr.mxu0 0.0
    %260 = vmatpush1.msra.mxu0 %v236
    %261 = vmatprep.subr.mxu0 0.0
    %262 = vmatpush1.msra.mxu0 %v235
    %263 = vmatprep.subr.mxu0 0.0
    %264 = vmatpush1.msra.mxu0 %v234
    %265 = vmatprep.subr.mxu0 0.0
    %266 = vmatpush1.msra.mxu0 %v233
    %267 = vmatprep.subr.mxu0 0.0
    %268 = vmatpush1.msra.mxu0 %v232
    %269 = vmatprep.subr.mxu0 0.0
    %270 = vmatpush1.msra.mxu0 %v231
    %271 = vmatprep.subr.mxu0 0.0
    %272 = vmatpush1.msra.mxu0 %v230
    %273 = vmatprep.subr.mxu0 0.0
    %274 = vmatpush1.msra.mxu0 %v229
    %275 = vmatprep.subr.mxu0 0.0
    %276 = vmatpush1.msra.mxu0 %v228
    %277 = vmatprep.subr.mxu0 0.0
    %278 = vmatpush1.msra.mxu0 %v227
    %279 = vmatprep.subr.mxu0 0.0
    %280 = vmatpush1.msra.mxu0 %v226
    %281 = vmatprep.subr.mxu0 0.0
    %282 = vmatpush2.msra.mxu0 0.0
    %283 = vmatprep.subr.mxu0 0.0
    %284 = vmatpush2.msra.mxu0 0.0
    %285 = vmatprep.subr.mxu0 0.0
    %286 = vmatpush2.msra.mxu0 0.0
    %287 = vmatprep.subr.mxu0 0.0
    %288 = vmatpush2.msra.mxu0 0.0
    %289 = vmatprep.subr.mxu0 0.0
    %290 = vmatpush2.msra.mxu0 0.0
    %291 = vmatprep.subr.mxu0 0.0
    %292 = vmatpush2.msra.mxu0 0.0
    %293 = vmatprep.subr.mxu0 0.0
    %294 = vmatpush2.msra.mxu0 0.0
    %295 = vmatprep.subr.mxu0 0.0
    %296 = vmatpush2.msra.mxu0 0.0
    %297 = vmatprep.subr.mxu0 0.0
    %298 = vmatpush2.msra.mxu0 0.0
    %299 = vmatprep.subr.mxu0 0.0
    %300 = vmatpush2.msra.mxu0 0.0
    %301 = vmatprep.subr.mxu0 0.0
    %302 = vmatpush2.msra.mxu0 0.0
    %303 = vmatprep.subr.mxu0 0.0
    %304 = vmatpush2.msra.mxu0 0.0
    %305 = vmatprep.subr.mxu0 0.0
    %306 = vmatpush2.msra.mxu0 0.0
    %307 = vmatprep.subr.mxu0 0.0
    %308 = vmatpush2.msra.mxu0 0.0
    %309 = vmatprep.subr.mxu0 0.0
    %310 = vmatpush2.msra.mxu0 0.0
    %311 = vmatprep.subr.mxu0 0.0
    %312 = vmatpush2.msra.mxu0 0.0
    %313 = vmatprep.mubr.f32.mxu0 0.0
    %314 = vmatmul.mubr.f32.gmra.mxu0 %v224
    %v315 = vpop.f32.mrf.mxu0
    %v316 = vadd.f32 %v247, %v315
    %v317 = vpop.f32.mrf.mxu0
    %318 = vmatprep.mubr.f32.mxu0 0.0
    %319 = vmatmul.mubr.f32.gmra.mxu0 %v225
    %v320 = vpop.f32.mrf.mxu0
    %v321 = vadd.f32 %v247, %v320
    %v322 = vpop.f32.mrf.mxu0
    %323 = vdwg.mxu0
    %324 = vst [vmem:[#allocation11] sm:$0xff] %v316
    %325 = vst [vmem:[#allocation11 + $0x8] sm:$0xff] %v321
    // Predicated region
    $region42: #{tpu_custom_call.1} parent=1 // pred_check
      _
    $region43: #{tpu_custom_call.1} parent=1 // pred_check_branch
      %327 = sbr.rel (0) target = $region45
    $region44: #{tpu_custom_call.1} parent=1 // pred_region
      %s329 = ssub.s32 256, 256
      %330 = vsyncadd [#allocation5], %s329
      %s331 = sshll.u32 [#allocation11], 4
      %s332 = int_to_ptr.vmem [resolvable:$true] %s331
      %337 = dma.vmem_to_hbm [thread:$0]  %s332, 256, %s5, [#allocation5], 128, 128, 8
    $region45: #{tpu_custom_call.1} parent=1 // pred_fallthru
      _
    // Predicated region
    $region46: #{tpu_custom_call.1} parent=1 // pred_check
      _
    $region47: #{tpu_custom_call.1} parent=1 // pred_check_branch
      %339 = sbr.rel (0) target = $region49
    $region48: #{tpu_custom_call.1} parent=1 // pred_region
      %340 = dma.done [#allocation5], 256
    $region49: #{tpu_custom_call.1} parent=1 // pred_fallthru
      _
    %341 = vsyncpa [#allocation4], 1
    %342 = vsyncpa [#allocation7], 1
    %343 = vsyncpa [#allocation10], 1
    %344 = vsyncpa [#allocation5], 1

</llo_original>
